<compile_context>
chip_gen: v7x
topology: tpu7x:2x2x1
jax: 0.10.0
libtpu: 0.0.40
codegen_flags: <defaults>
</compile_context>

<pallas_src>
import functools

import jax
import jax.numpy as jnp
from jax import lax
from jax.experimental import pallas as pl
from jax.experimental.pallas import tpu as pltpu


def _gelu_tanh(h):
    # tanh-approximate GELU (EUP-friendly).
    # TODO(synk): torch.nn.GELU defaults to exact erf; tanh approx differs by ~1e-3/elem.
    return 0.5 * h * (1.0 + jnp.tanh(0.7978845608028654 * (h + 0.044715 * h * h * h)))


def continuous_block_kernel(x_ref, w1_ref, b1_ref, w2_ref, b2_ref, hs_ref, x_state):
    """Grid = (token tiles, layers).  One grid step applies ONE residual layer to ONE
    (tm, D) token tile.

    x_ref  : (tm, D)      input tile (f32); fetched once per tile (index map ignores layer)
    w1/w2  : (D, D)       shared residual-layer weights (bf16, identical layers)
    b1/b2  : (1, D)       biases (f32)
    hs_ref : (1, tm, D)   this layer's hidden-state block (written exactly once per step)
    x_state: (tm, D) f32  VMEM scratch carrying the running state across the layer axis.
    """
    layer = pl.program_id(1)

    @pl.when(layer == 0)
    def _():
        x_state[...] = x_ref[...].astype(jnp.float32)

    x = x_state[...]
    # Residual layer: Linear -> GELU(tanh) -> Linear; bf16 MXU operands, f32 accumulation.
    h = jnp.dot(x.astype(jnp.bfloat16), w1_ref[...],
                preferred_element_type=jnp.float32) + b1_ref[...]
    h = _gelu_tanh(h)
    r = jnp.dot(h.astype(jnp.bfloat16), w2_ref[...],
                preferred_element_type=jnp.float32) + b2_ref[...]
    x_new = x + r                                   # ContinuousLayer: state + residual(state)

    x_state[...] = x_new                            # carry to the next layer (same tile)
    hs_ref[0, :, :] = x_new.astype(hs_ref.dtype)    # hidden_states[name].append(x.clone())


def _round_up(a, b):
    return (a + b - 1) // b * b


def _vmem_capacity_bytes():
    try:
        return int(pltpu.get_tpu_info().vmem_capacity_bytes)
    except Exception:
        return 64 * 2**20          # conservative fallback (v7x per-TC VMEM)


def continuous_block(x, w1, b1, w2, b2, *, num_layers, tm=512):
    """x: (B, S, D) float32.  Returns (final_state (B,S,D), hidden_states (L,B,S,D))."""
    B, S, D = x.shape
    N = B * S
    assert D % 128 == 0, "hidden dim must be a multiple of the 128-wide lane axis"

    # --- generation-aware VMEM budget ------------------------------------------------
    cap = _vmem_capacity_bytes()
    vmem_budget = (cap * 7) // 10      # ~45 MiB on v7x (64 MiB), ~90 MiB on v5e/v6e (128 MiB)

    def vmem_estimate(t):
        return (2 * t * D * 4          # x input tile (double-buffered, f32)
                + 2 * t * D * 4        # per-layer hs output block (double-buffered, f32)
                + t * D * 4            # state-carry scratch
                + 2 * 2 * D * D * 2    # w1, w2 bf16 (conservatively assume 2 copies each)
                + 4 * D * 4)           # biases

    # --- token tile selection ----------------------------------------------------------
    if N >= 128:
        tm_eff = min(_round_up(tm, 128), _round_up(N, 128))
    else:
        tm_eff = N                     # one block == full extent (no (8,128) constraint)
    while tm_eff > 128 and vmem_estimate(tm_eff) > vmem_budget:
        tm_eff = max(128, tm_eff - 128)

    n_tiles = pl.cdiv(N, tm_eff)       # ragged edge handled by Pallas block clipping
                                       # (no pad of x, no hs[:, :N, :] copy afterwards)

    x2 = x.reshape(N, D).astype(jnp.float32)
    w1_bf = w1.astype(jnp.bfloat16)
    w2_bf = w2.astype(jnp.bfloat16)
    b1_2 = b1.reshape(1, D).astype(jnp.float32)
    b2_2 = b2.reshape(1, D).astype(jnp.float32)

    vmem_limit = int(min(max(vmem_budget, 2 * vmem_estimate(tm_eff)), (cap * 9) // 10))

    def build(single_buffer_invariants):
        def inv_spec(shape):
            # Grid-invariant operands: block index never changes, single buffer suffices.
            if single_buffer_invariants:
                return pl.BlockSpec(shape, lambda i, l: (0,) * len(shape),
                                    pipeline_mode=pl.Buffered(1))
            return pl.BlockSpec(shape, lambda i, l: (0,) * len(shape))

        return pl.pallas_call(
            continuous_block_kernel,
            out_shape=jax.ShapeDtypeStruct((num_layers, N, D), jnp.float32),
            grid_spec=pltpu.PrefetchScalarGridSpec(
                num_scalar_prefetch=0,
                grid=(n_tiles, num_layers),          # layers innermost -> sequential recurrence
                in_specs=[
                    pl.BlockSpec((tm_eff, D), lambda i, l: (i, 0)),  # x tile (fetched once per i)
                    inv_spec((D, D)),                                # w1 (shared across layers)
                    inv_spec((1, D)),                                # b1
                    inv_spec((D, D)),                                # w2
                    inv_spec((1, D)),                                # b2
                ],
                out_specs=pl.BlockSpec((1, tm_eff, D), lambda i, l: (l, i, 0)),
                scratch_shapes=[pltpu.VMEM((tm_eff, D), jnp.float32)],   # state carry
            ),
            compiler_params=pltpu.CompilerParams(
                dimension_semantics=("parallel", "arbitrary"),
                vmem_limit_bytes=vmem_limit,
            ),
        )

    try:
        hs = build(True)(x2, w1_bf, b1_2, w2_bf, b2_2)
    except Exception:
        # TODO(synk): fallback if pipeline_mode=pl.Buffered(1) is unsupported in this jax build.
        hs = build(False)(x2, w1_bf, b1_2, w2_bf, b2_2)

    out = hs[num_layers - 1]           # final state == last hidden state (no separate write)
    return out.reshape(B, S, D), hs.reshape(num_layers, B, S, D)


def continuous_block_ref(x, w1, b1, w2, b2, *, num_layers, matmul_dtype=jnp.float32):
    """Pure-JAX reference (mirrors ContinuousBlock.forward with store_hidden_states=True).

    `matmul_dtype=jnp.bfloat16` mirrors the kernel's bf16-operand / f32-accumulate math.
    """
    B, S, D = x.shape
    xf = x.reshape(B * S, D).astype(jnp.float32)
    w1c = w1.astype(matmul_dtype)
    w2c = w2.astype(matmul_dtype)
    hs = []
    for _ in range(num_layers):
        h = jnp.dot(xf.astype(matmul_dtype), w1c,
                    preferred_element_type=jnp.float32) + b1[None, :]
        h = _gelu_tanh(h)
        r = jnp.dot(h.astype(matmul_dtype), w2c,
                    preferred_element_type=jnp.float32) + b2[None, :]
        xf = xf + r
        hs.append(xf)
    return xf.reshape(B, S, D), jnp.stack(hs).reshape(num_layers, B, S, D)


if __name__ == "__main__":
    B, S, D = 2, 8, 128      # batch, seq, hidden (hidden = 128 lanes)
    NUM_LAYERS = 3

    key = jax.random.PRNGKey(0)
    kx, k1, kb1, k2, kb2 = jax.random.split(key, 5)

    x = jax.random.normal(kx, (B, S, D), dtype=jnp.float32)

    # PyTorch nn.Linear-style uniform(-1/sqrt(fan_in), 1/sqrt(fan_in)) init,
    # single set of weights shared by all layers (deepcopy-of-one-layer semantics).
    bound = 1.0 / jnp.sqrt(jnp.float32(D))
    w1 = jax.random.uniform(k1, (D, D), jnp.float32, -bound, bound)
    b1 = jax.random.uniform(kb1, (D,), jnp.float32, -bound, bound)
    w2 = jax.random.uniform(k2, (D, D), jnp.float32, -bound, bound)
    b2 = jax.random.uniform(kb2, (D,), jnp.float32, -bound, bound)

    out, hidden_states = continuous_block(x, w1, b1, w2, b2, num_layers=NUM_LAYERS)
    out = jax.block_until_ready(out)
    hidden_states = jax.block_until_ready(hidden_states)

    # Reference that matches the kernel math (bf16 MXU operands, f32 accumulate).
    out_bref, hs_bref = continuous_block_ref(x, w1, b1, w2, b2, num_layers=NUM_LAYERS,
                                             matmul_dtype=jnp.bfloat16)
    # Full-f32 reference (module semantics) with a looser tolerance for the bf16 matmuls.
    out_fref, hs_fref = continuous_block_ref(x, w1, b1, w2, b2, num_layers=NUM_LAYERS,
                                             matmul_dtype=jnp.float32)

    assert out.shape == (B, S, D)
    assert hidden_states.shape == (NUM_LAYERS, B, S, D)
    assert jnp.allclose(out, out_bref, atol=5e-3, rtol=5e-3)
    assert jnp.allclose(hidden_states, hs_bref, atol=5e-3, rtol=5e-3)
    assert jnp.allclose(out, out_fref, atol=5e-2, rtol=5e-2)
    assert jnp.allclose(hidden_states, hs_fref, atol=5e-2, rtol=5e-2)
    # last hidden state equals final state (as in the torch loop)
    assert jnp.allclose(hidden_states[-1], out, atol=1e-6)

    print("KERNEL_OK")
</pallas_src>

<mosaic_0001>
module attributes {stable_mosaic.version = 11 : i64} {
  func.func @continuous_block_kernel(%arg0: i32, %arg1: i32, %arg2: memref<16x128xf32, #tpu.memory_space<vmem>>, %arg3: memref<128x128xbf16, #tpu.memory_space<vmem>>, %arg4: memref<1x128xf32, #tpu.memory_space<vmem>>, %arg5: memref<128x128xbf16, #tpu.memory_space<vmem>>, %arg6: memref<1x128xf32, #tpu.memory_space<vmem>>, %arg7: memref<1x16x128xf32, #tpu.memory_space<vmem>>, %arg8: memref<16x128xf32, #tpu.memory_space<vmem>>) attributes {dimension_semantics = [#tpu.dimension_semantics<parallel>, #tpu.dimension_semantics<arbitrary>], iteration_bounds = array<i64: 1, 3>, scalar_prefetch = 0 : i64, scratch_operands = 1 : i64, tpu.core_type = #tpu.core_type<tc>, window_params = [{transform_indices = @transform_0, window_bounds = array<i64: 16, 128>}, {pipeline_mode = #tpu.pipeline_mode<synchronous>, transform_indices = @transform_1, window_bounds = array<i64: 128, 128>}, {pipeline_mode = #tpu.pipeline_mode<synchronous>, transform_indices = @transform_2, window_bounds = array<i64: 1, 128>}, {pipeline_mode = #tpu.pipeline_mode<synchronous>, transform_indices = @transform_3, window_bounds = array<i64: 128, 128>}, {pipeline_mode = #tpu.pipeline_mode<synchronous>, transform_indices = @transform_4, window_bounds = array<i64: 1, 128>}, {transform_indices = @transform_5, window_bounds = array<i64: 1, 16, 128>}]} {
    %c0_i32 = arith.constant 0 : i32
    %0 = arith.cmpi eq, %arg1, %c0_i32 : i32
    %1 = arith.extui %0 : i1 to i32
    %c0_i32_0 = arith.constant 0 : i32
    %2 = arith.cmpi ne, %1, %c0_i32_0 : i32
    scf.if %2 {
      %c0_20 = arith.constant 0 : index
      %c0_21 = arith.constant 0 : index
      %34 = vector.load %arg2[%c0_20, %c0_21] : memref<16x128xf32, #tpu.memory_space<vmem>>, vector<16x128xf32>
      %c0_22 = arith.constant 0 : index
      %c0_23 = arith.constant 0 : index
      %35 = vector.load %arg8[%c0_22, %c0_23] : memref<16x128xf32, #tpu.memory_space<vmem>>, vector<16x128xf32>
      tpu.vector_store %arg8[%c0_22, %c0_23], %34 {strides = array<i32>} : memref<16x128xf32, #tpu.memory_space<vmem>>, vector<16x128xf32>,
    } else {
    }
    %c0 = arith.constant 0 : index
    %c0_1 = arith.constant 0 : index
    %3 = vector.load %arg8[%c0, %c0_1] : memref<16x128xf32, #tpu.memory_space<vmem>>, vector<16x128xf32>
    %4 = arith.truncf %3 : vector<16x128xf32> to vector<16x128xbf16>
    %c0_2 = arith.constant 0 : index
    %c0_3 = arith.constant 0 : index
    %5 = vector.load %arg3[%c0_2, %c0_3] : memref<128x128xbf16, #tpu.memory_space<vmem>>, vector<128x128xbf16>
    %cst = arith.constant dense<0.000000e+00> : vector<16x128xf32>
    %6 = tpu.matmul %4, %5, %cst {dimension_numbers = #tpu.dot_dimension_numbers<[1], [0], [0], [1], [0, 0, 1, 1], [], []>} : vector<16x128xbf16>, vector<128x128xbf16>, vector<16x128xf32> -> vector<16x128xf32>
    %c0_4 = arith.constant 0 : index
    %c0_5 = arith.constant 0 : index
    %7 = vector.load %arg4[%c0_4, %c0_5] : memref<1x128xf32, #tpu.memory_space<vmem>>, vector<1x128xf32>
    %8 = vector.broadcast %7 : vector<1x128xf32> to vector<16x128xf32>
    %9 = arith.addf %6, %8 : vector<16x128xf32>
    %cst_6 = arith.constant 5.000000e-01 : f32
    %10 = vector.broadcast %cst_6 : f32 to vector<16x128xf32>
    %11 = arith.mulf %10, %9 : vector<16x128xf32>
    %cst_7 = arith.constant 4.471500e-02 : f32
    %12 = vector.broadcast %cst_7 : f32 to vector<16x128xf32>
    %13 = arith.mulf %12, %9 : vector<16x128xf32>
    %14 = arith.mulf %13, %9 : vector<16x128xf32>
    %15 = arith.mulf %14, %9 : vector<16x128xf32>
    %16 = arith.addf %9, %15 : vector<16x128xf32>
    %cst_8 = arith.constant 0.797884583 : f32
    %17 = vector.broadcast %cst_8 : f32 to vector<16x128xf32>
    %18 = arith.mulf %17, %16 : vector<16x128xf32>
    %19 = math.tanh %18 : vector<16x128xf32>
    %cst_9 = arith.constant 1.000000e+00 : f32
    %20 = vector.broadcast %cst_9 : f32 to vector<16x128xf32>
    %21 = arith.addf %20, %19 : vector<16x128xf32>
    %22 = arith.mulf %11, %21 : vector<16x128xf32>
    %23 = arith.truncf %22 : vector<16x128xf32> to vector<16x128xbf16>
    %c0_10 = arith.constant 0 : index
    %c0_11 = arith.constant 0 : index
    %24 = vector.load %arg5[%c0_10, %c0_11] : memref<128x128xbf16, #tpu.memory_space<vmem>>, vector<128x128xbf16>
    %cst_12 = arith.constant dense<0.000000e+00> : vector<16x128xf32>
    %25 = tpu.matmul %23, %24, %cst_12 {dimension_numbers = #tpu.dot_dimension_numbers<[1], [0], [0], [1], [0, 0, 1, 1], [], []>} : vector<16x128xbf16>, vector<128x128xbf16>, vector<16x128xf32> -> vector<16x128xf32>
    %c0_13 = arith.constant 0 : index
    %c0_14 = arith.constant 0 : index
    %26 = vector.load %arg6[%c0_13, %c0_14] : memref<1x128xf32, #tpu.memory_space<vmem>>, vector<1x128xf32>
    %27 = vector.broadcast %26 : vector<1x128xf32> to vector<16x128xf32>
    %28 = arith.addf %25, %27 : vector<16x128xf32>
    %29 = arith.addf %3, %28 : vector<16x128xf32>
    %c0_15 = arith.constant 0 : index
    %c0_16 = arith.constant 0 : index
    %30 = vector.load %arg8[%c0_15, %c0_16] : memref<16x128xf32, #tpu.memory_space<vmem>>, vector<16x128xf32>
    tpu.vector_store %arg8[%c0_15, %c0_16], %29 {strides = array<i32>} : memref<16x128xf32, #tpu.memory_space<vmem>>, vector<16x128xf32>,
    %c0_17 = arith.constant 0 : index
    %c0_18 = arith.constant 0 : index
    %c0_19 = arith.constant 0 : index
    %31 = vector.load %arg7[%c0_17, %c0_18, %c0_19] : memref<1x16x128xf32, #tpu.memory_space<vmem>>, vector<1x16x128xf32>
    %32 = vector.shape_cast %31 : vector<1x16x128xf32> to vector<16x128xf32>
    %33 = vector.shape_cast %29 : vector<16x128xf32> to vector<1x16x128xf32>
    tpu.vector_store %arg7[%c0_17, %c0_18, %c0_19], %33 {strides = array<i32>} : memref<1x16x128xf32, #tpu.memory_space<vmem>>, vector<1x16x128xf32>,
    return
  }
  func.func @transform_0(%arg0: i32, %arg1: i32) -> (i32, i32) {
    %c0_i32 = arith.constant 0 : i32
    %c0_i32_0 = arith.constant 0 : i32
    return %arg0, %c0_i32 : i32, i32
  }
  func.func @transform_1(%arg0: i32, %arg1: i32) -> (i32, i32) {
    %c0_i32 = arith.constant 0 : i32
    %c0_i32_0 = arith.constant 0 : i32
    %c0_i32_1 = arith.constant 0 : i32
    return %c0_i32, %c0_i32_0 : i32, i32
  }
  func.func @transform_2(%arg0: i32, %arg1: i32) -> (i32, i32) {
    %c0_i32 = arith.constant 0 : i32
    %c0_i32_0 = arith.constant 0 : i32
    %c0_i32_1 = arith.constant 0 : i32
    return %c0_i32, %c0_i32_0 : i32, i32
  }
  func.func @transform_3(%arg0: i32, %arg1: i32) -> (i32, i32) {
    %c0_i32 = arith.constant 0 : i32
    %c0_i32_0 = arith.constant 0 : i32
    %c0_i32_1 = arith.constant 0 : i32
    return %c0_i32, %c0_i32_0 : i32, i32
  }
  func.func @transform_4(%arg0: i32, %arg1: i32) -> (i32, i32) {
    %c0_i32 = arith.constant 0 : i32
    %c0_i32_0 = arith.constant 0 : i32
    %c0_i32_1 = arith.constant 0 : i32
    return %c0_i32, %c0_i32_0 : i32, i32
  }
  func.func @transform_5(%arg0: i32, %arg1: i32) -> (i32, i32, i32) {
    %c0_i32 = arith.constant 0 : i32
    %c0_i32_0 = arith.constant 0 : i32
    return %arg1, %arg0, %c0_i32 : i32, i32, i32
  }
}

module attributes {stable_mosaic.version = 11 : i64} {
  func.func @continuous_block_kernel(%arg0: i32, %arg1: i32, %arg2: memref<16x128xf32, #tpu.memory_space<vmem>>, %arg3: memref<128x128xbf16, #tpu.memory_space<vmem>>, %arg4: memref<1x128xf32, #tpu.memory_space<vmem>>, %arg5: memref<128x128xbf16, #tpu.memory_space<vmem>>, %arg6: memref<1x128xf32, #tpu.memory_space<vmem>>, %arg7: memref<1x16x128xf32, #tpu.memory_space<vmem>>, %arg8: memref<16x128xf32, #tpu.memory_space<vmem>>) attributes {dimension_semantics = [#tpu.dimension_semantics<parallel>, #tpu.dimension_semantics<arbitrary>], iteration_bounds = array<i64: 1, 3>, scalar_prefetch = 0 : i64, scratch_operands = 1 : i64, tpu.core_type = #tpu.core_type<tc>, window_params = [{transform_indices = @transform_0, window_bounds = array<i64: 16, 128>}, {pipeline_mode = #tpu.pipeline_mode<synchronous>, transform_indices = @transform_1, window_bounds = array<i64: 128, 128>}, {pipeline_mode = #tpu.pipeline_mode<synchronous>, transform_indices = @transform_2, window_bounds = array<i64: 1, 128>}, {pipeline_mode = #tpu.pipeline_mode<synchronous>, transform_indices = @transform_3, window_bounds = array<i64: 128, 128>}, {pipeline_mode = #tpu.pipeline_mode<synchronous>, transform_indices = @transform_4, window_bounds = array<i64: 1, 128>}, {transform_indices = @transform_5, window_bounds = array<i64: 1, 16, 128>}]} {
    %c0_i32 = arith.constant 0 : i32
    %0 = arith.cmpi eq, %arg1, %c0_i32 : i32
    %1 = arith.extui %0 : i1 to i32
    %c0_i32_0 = arith.constant 0 : i32
    %2 = arith.cmpi ne, %1, %c0_i32_0 : i32
    scf.if %2 {
      %c0_20 = arith.constant 0 : index
      %c0_21 = arith.constant 0 : index
      %34 = vector.load %arg2[%c0_20, %c0_21] : memref<16x128xf32, #tpu.memory_space<vmem>>, vector<16x128xf32>
      %c0_22 = arith.constant 0 : index
      %c0_23 = arith.constant 0 : index
      %35 = vector.load %arg8[%c0_22, %c0_23] : memref<16x128xf32, #tpu.memory_space<vmem>>, vector<16x128xf32>
      tpu.vector_store %arg8[%c0_22, %c0_23], %34 {strides = array<i32>} : memref<16x128xf32, #tpu.memory_space<vmem>>, vector<16x128xf32>,
    } else {
    }
    %c0 = arith.constant 0 : index
    %c0_1 = arith.constant 0 : index
    %3 = vector.load %arg8[%c0, %c0_1] : memref<16x128xf32, #tpu.memory_space<vmem>>, vector<16x128xf32>
    %4 = arith.truncf %3 : vector<16x128xf32> to vector<16x128xbf16>
    %c0_2 = arith.constant 0 : index
    %c0_3 = arith.constant 0 : index
    %5 = vector.load %arg3[%c0_2, %c0_3] : memref<128x128xbf16, #tpu.memory_space<vmem>>, vector<128x128xbf16>
    %cst = arith.constant dense<0.000000e+00> : vector<16x128xf32>
    %6 = tpu.matmul %4, %5, %cst {dimension_numbers = #tpu.dot_dimension_numbers<[1], [0], [0], [1], [0, 0, 1, 1], [], []>} : vector<16x128xbf16>, vector<128x128xbf16>, vector<16x128xf32> -> vector<16x128xf32>
    %c0_4 = arith.constant 0 : index
    %c0_5 = arith.constant 0 : index
    %7 = vector.load %arg4[%c0_4, %c0_5] : memref<1x128xf32, #tpu.memory_space<vmem>>, vector<1x128xf32>
    %8 = vector.broadcast %7 : vector<1x128xf32> to vector<16x128xf32>
    %9 = arith.addf %6, %8 : vector<16x128xf32>
    %cst_6 = arith.constant 5.000000e-01 : f32
    %10 = vector.broadcast %cst_6 : f32 to vector<16x128xf32>
    %11 = arith.mulf %10, %9 : vector<16x128xf32>
    %cst_7 = arith.constant 4.471500e-02 : f32
    %12 = vector.broadcast %cst_7 : f32 to vector<16x128xf32>
    %13 = arith.mulf %12, %9 : vector<16x128xf32>
    %14 = arith.mulf %13, %9 : vector<16x128xf32>
    %15 = arith.mulf %14, %9 : vector<16x128xf32>
    %16 = arith.addf %9, %15 : vector<16x128xf32>
    %cst_8 = arith.constant 0.797884583 : f32
    %17 = vector.broadcast %cst_8 : f32 to vector<16x128xf32>
    %18 = arith.mulf %17, %16 : vector<16x128xf32>
    %19 = math.tanh %18 : vector<16x128xf32>
    %cst_9 = arith.constant 1.000000e+00 : f32
    %20 = vector.broadcast %cst_9 : f32 to vector<16x128xf32>
    %21 = arith.addf %20, %19 : vector<16x128xf32>
    %22 = arith.mulf %11, %21 : vector<16x128xf32>
    %23 = arith.truncf %22 : vector<16x128xf32> to vector<16x128xbf16>
    %c0_10 = arith.constant 0 : index
    %c0_11 = arith.constant 0 : index
    %24 = vector.load %arg5[%c0_10, %c0_11] : memref<128x128xbf16, #tpu.memory_space<vmem>>, vector<128x128xbf16>
    %cst_12 = arith.constant dense<0.000000e+00> : vector<16x128xf32>
    %25 = tpu.matmul %23, %24, %cst_12 {dimension_numbers = #tpu.dot_dimension_numbers<[1], [0], [0], [1], [0, 0, 1, 1], [], []>} : vector<16x128xbf16>, vector<128x128xbf16>, vector<16x128xf32> -> vector<16x128xf32>
    %c0_13 = arith.constant 0 : index
    %c0_14 = arith.constant 0 : index
    %26 = vector.load %arg6[%c0_13, %c0_14] : memref<1x128xf32, #tpu.memory_space<vmem>>, vector<1x128xf32>
    %27 = vector.broadcast %26 : vector<1x128xf32> to vector<16x128xf32>
    %28 = arith.addf %25, %27 : vector<16x128xf32>
    %29 = arith.addf %3, %28 : vector<16x128xf32>
    %c0_15 = arith.constant 0 : index
    %c0_16 = arith.constant 0 : index
    %30 = vector.load %arg8[%c0_15, %c0_16] : memref<16x128xf32, #tpu.memory_space<vmem>>, vector<16x128xf32>
    tpu.vector_store %arg8[%c0_15, %c0_16], %29 {strides = array<i32>} : memref<16x128xf32, #tpu.memory_space<vmem>>, vector<16x128xf32>,
    %c0_17 = arith.constant 0 : index
    %c0_18 = arith.constant 0 : index
    %c0_19 = arith.constant 0 : index
    %31 = vector.load %arg7[%c0_17, %c0_18, %c0_19] : memref<1x16x128xf32, #tpu.memory_space<vmem>>, vector<1x16x128xf32>
    %32 = vector.shape_cast %31 : vector<1x16x128xf32> to vector<16x128xf32>
    %33 = vector.shape_cast %29 : vector<16x128xf32> to vector<1x16x128xf32>
    tpu.vector_store %arg7[%c0_17, %c0_18, %c0_19], %33 {strides = array<i32>} : memref<1x16x128xf32, #tpu.memory_space<vmem>>, vector<1x16x128xf32>,
    return
  }
  func.func @transform_0(%arg0: i32, %arg1: i32) -> (i32, i32) {
    %c0_i32 = arith.constant 0 : i32
    %c0_i32_0 = arith.constant 0 : i32
    return %arg0, %c0_i32 : i32, i32
  }
  func.func @transform_1(%arg0: i32, %arg1: i32) -> (i32, i32) {
    %c0_i32 = arith.constant 0 : i32
    %c0_i32_0 = arith.constant 0 : i32
    %c0_i32_1 = arith.constant 0 : i32
    return %c0_i32, %c0_i32_0 : i32, i32
  }
  func.func @transform_2(%arg0: i32, %arg1: i32) -> (i32, i32) {
    %c0_i32 = arith.constant 0 : i32
    %c0_i32_0 = arith.constant 0 : i32
    %c0_i32_1 = arith.constant 0 : i32
    return %c0_i32, %c0_i32_0 : i32, i32
  }
  func.func @transform_3(%arg0: i32, %arg1: i32) -> (i32, i32) {
    %c0_i32 = arith.constant 0 : i32
    %c0_i32_0 = arith.constant 0 : i32
    %c0_i32_1 = arith.constant 0 : i32
    return %c0_i32, %c0_i32_0 : i32, i32
  }
  func.func @transform_4(%arg0: i32, %arg1: i32) -> (i32, i32) {
    %c0_i32 = arith.constant 0 : i32
    %c0_i32_0 = arith.constant 0 : i32
    %c0_i32_1 = arith.constant 0 : i32
    return %c0_i32, %c0_i32_0 : i32, i32
  }
  func.func @transform_5(%arg0: i32, %arg1: i32) -> (i32, i32, i32) {
    %c0_i32 = arith.constant 0 : i32
    %c0_i32_0 = arith.constant 0 : i32
    return %arg1, %arg0, %c0_i32 : i32, i32, i32
  }
}

</mosaic_0001>

<llo_original>
// kernel: tpu_custom_call.1
$region0: #{tpu_custom_call.1}
  #allocation0 [shape = 'u32[]', space=smem, size = 0x4, offset = 0x4, fixed_abs, tag = 'smem constant byte address 0x4 - core index']
  #allocation1 [shape = 'u32[144,128]{1,0:T(1,128)}', space=vmem, size = 0x12000, scoped, tag = 'internal scratch']
  #allocation2 [shape = 'f32[16,128]{1,0:T(8,128)}', space=vmem, size = 0x2000, scoped, tag = 'scratch operand']
  %s0 = inlined_call_operand.hbm [shape: f32[16,128], index: 0, kind: input, shape index: {}]
  %s1 = inlined_call_operand.hbm [shape: bf16[128,128], index: 1, kind: input, shape index: {}]
  %s2 = inlined_call_operand.vmem [shape: f32[1,128], index: 2, kind: input, shape index: {}]
  %s3 = inlined_call_operand.hbm [shape: bf16[128,128], index: 3, kind: input, shape index: {}]
  %s4 = inlined_call_operand.vmem [shape: f32[1,128], index: 4, kind: input, shape index: {}]
  %s5 = inlined_call_operand.hbm [shape: f32[3,16,128], index: 5, kind: output, shape index: {}]
  %s6 = sld [smem:[#allocation0]]
  $region69: #{tpu_custom_call.1} parent=0
    _
  %s8 = ssub.s32 1, %s6
  %s9 = scalar_select 0, %s8, %s6
  $region1: #{tpu_custom_call.1} parent=0
    #allocation3 [shape = 'u8[8192]{0}', space=vmem, size = 0x2000, scoped, tag = 'input window, operand 0, single buffered']
    #allocation4 [shape = 's32[2]{0}', space=sflag, size = 0x8, scoped, tag = 'scoped memory for tpu_custom_call.1']
    #allocation5 [shape = 's32[2]{0}', space=sflag, size = 0x8, scoped, tag = 'scoped memory for tpu_custom_call.1']
    #allocation6 [shape = 'u8[32768]{0}', space=vmem, size = 0x8000, scoped, tag = 'input window, operand 1, single buffered']
    #allocation7 [shape = 's32[1]{0}', space=sflag, size = 0x4, scoped, tag = 'scoped memory for tpu_custom_call.1']
    #allocation8 [shape = 'u8[32768]{0}', space=vmem, size = 0x8000, scoped, tag = 'input window, operand 3, single buffered']
    #allocation9 [shape = 'u8[16384]{0}', space=vmem, size = 0x4000, scoped, tag = 'output window, operand 0']
    %10 = vsyncpa [#allocation4], 0
    %11 = vsyncpa [#allocation7], 0
    %12 = vsyncpa [#allocation5], 0
    %s13 = scalar_lea.sflag [#allocation5], 1
    %14 = vsyncpa %s13, 0
    loop: start=0, step=1, limit=5
    $region2: #{tpu_custom_call.1} parent=1 // loop_pre_header
      _
    $region3: #{tpu_custom_call.1} parent=1 // loop_header
      %s16 = sphi 0, %s20
      %p17 = scmp.ge.s32.totalorder %s16, 5
      %s23 = sphi 0, %s35
      %s24 = sphi 0, %s31
      %s25 = sphi 0, %s23
      %s26 = sphi 0, %s24
      %s27 = sphi 0, %s25
      %s28 = sphi 0, %s26
      %s38 = sphi 0, %s40
      %s41 = sphi 0, %s38
      %s42 = sphi 0, %s41
      %s58 = sphi 0, %s42
      %s62 = sphi 0, %s62
      %s64 = sphi 0, %s62
      %s65 = sphi 0, %s64
      %s79 = sphi 0, %s65
      %s83 = sphi 0, %s83
      %s85 = sphi 0, %s83
      %s86 = sphi 0, %s85
      %s100 = sphi 0, %s86
      %s104 = sphi 0, %s104
      %s106 = sphi 0, %s104
      %s107 = sphi 0, %s106
      %s121 = sphi 0, %s107
      %s125 = sphi 0, %s125
      %s127 = sphi 0, %s125
      %s128 = sphi 0, %s127
      %s142 = sphi 0, %s128
      %s150 = sphi 0, %s152
      %s153 = sphi 0, %s150
      %s154 = sphi 0, %s153
      %s170 = sphi 0, %s154
    $region4: #{tpu_custom_call.1} parent=1 // loop_header_branch
      %19 = sbr.rel (%p17) target = $region8
    $region5: #{tpu_custom_call.1} parent=1 // loop_body
      %s21 = ssub.s32 %s16, 1
      %s22 = ssub.s32 %s16, 2
      %s29 = sadd.s32 1, %s24
      %p30 = scmp.ge.s32.totalorder %s29, 3
      %s31 = scalar_select %p30, 0, %s29
      %s32 = sadd.s32 1, %s23
      %s33 = scalar_select %p30, %s32, %s23
      %p34 = scmp.ge.s32.totalorder %s33, 1
      %s35 = scalar_select %p34, 0, %s33
      %s36 = ssub.s32 %s23, %s35
      %p37 = scmp.eq.s32.totalorder %s36, 0
      %s39 = sadd.s32 %s38, 1
      %s40 = scalar_select %p37, %s38, %s39
      %p43 = pneg %p37
      %p44 = scmp.eq.s32.totalorder %s16, 2
      %p45 = por %p43, %p44
      %p46 = scmp.ne.s32.totalorder %s38, %s41
      %p47 = scmp.eq.s32.totalorder %s16, 0
      %p48 = por %p46, %p47
      %p49 = scmp.ne.s32.totalorder %s38, %s41
      %p50 = scmp.eq.s32.totalorder %s21, 2
      %p51 = por %p49, %p50
      %p52 = scmp.ne.s32.totalorder %s41, %s42
      %p53 = scmp.eq.s32.totalorder %s21, 0
      %p54 = por %p52, %p53
      %p55 = scmp.ne.s32.totalorder %s41, %s42
      %p56 = scmp.eq.s32.totalorder %s22, 2
      %p57 = por %p55, %p56
      %p59 = scmp.ne.s32.totalorder %s42, %s58
      %p60 = scmp.eq.s32.totalorder %s22, 0
      %p61 = por %p59, %p60
      %s63 = sadd.s32 %s62, 1
      %p66 = scmp.eq.s32.totalorder %s16, 2
      %p67 = scmp.ne.s32.totalorder %s62, %s64
      %p68 = scmp.eq.s32.totalorder %s16, 0
      %p69 = por %p67, %p68
      %p70 = scmp.ne.s32.totalorder %s62, %s64
      %p71 = scmp.eq.s32.totalorder %s21, 2
      %p72 = por %p70, %p71
      %p73 = scmp.ne.s32.totalorder %s64, %s65
      %p74 = scmp.eq.s32.totalorder %s21, 0
      %p75 = por %p73, %p74
      %p76 = scmp.ne.s32.totalorder %s64, %s65
      %p77 = scmp.eq.s32.totalorder %s22, 2
      %p78 = por %p76, %p77
      %p80 = scmp.ne.s32.totalorder %s65, %s79
      %p81 = scmp.eq.s32.totalorder %s22, 0
      %p82 = por %p80, %p81
      %s84 = sadd.s32 %s83, 1
      %p87 = scmp.eq.s32.totalorder %s16, 2
      %p88 = scmp.ne.s32.totalorder %s83, %s85
      %p89 = scmp.eq.s32.totalorder %s16, 0
      %p90 = por %p88, %p89
      %p91 = scmp.ne.s32.totalorder %s83, %s85
      %p92 = scmp.eq.s32.totalorder %s21, 2
      %p93 = por %p91, %p92
      %p94 = scmp.ne.s32.totalorder %s85, %s86
      %p95 = scmp.eq.s32.totalorder %s21, 0
      %p96 = por %p94, %p95
      %p97 = scmp.ne.s32.totalorder %s85, %s86
      %p98 = scmp.eq.s32.totalorder %s22, 2
      %p99 = por %p97, %p98
      %p101 = scmp.ne.s32.totalorder %s86, %s100
      %p102 = scmp.eq.s32.totalorder %s22, 0
      %p103 = por %p101, %p102
      %s105 = sadd.s32 %s104, 1
      %p108 = scmp.eq.s32.totalorder %s16, 2
      %p109 = scmp.ne.s32.totalorder %s104, %s106
      %p110 = scmp.eq.s32.totalorder %s16, 0
      %p111 = por %p109, %p110
      %p112 = scmp.ne.s32.totalorder %s104, %s106
      %p113 = scmp.eq.s32.totalorder %s21, 2
      %p114 = por %p112, %p113
      %p115 = scmp.ne.s32.totalorder %s106, %s107
      %p116 = scmp.eq.s32.totalorder %s21, 0
      %p117 = por %p115, %p116
      %p118 = scmp.ne.s32.totalorder %s106, %s107
      %p119 = scmp.eq.s32.totalorder %s22, 2
      %p120 = por %p118, %p119
      %p122 = scmp.ne.s32.totalorder %s107, %s121
      %p123 = scmp.eq.s32.totalorder %s22, 0
      %p124 = por %p122, %p123
      %s126 = sadd.s32 %s125, 1
      %p129 = scmp.eq.s32.totalorder %s16, 2
      %p130 = scmp.ne.s32.totalorder %s125, %s127
      %p131 = scmp.eq.s32.totalorder %s16, 0
      %p132 = por %p130, %p131
      %p133 = scmp.ne.s32.totalorder %s125, %s127
      %p134 = scmp.eq.s32.totalorder %s21, 2
      %p135 = por %p133, %p134
      %p136 = scmp.ne.s32.totalorder %s127, %s128
      %p137 = scmp.eq.s32.totalorder %s21, 0
      %p138 = por %p136, %p137
      %p139 = scmp.ne.s32.totalorder %s127, %s128
      %p140 = scmp.eq.s32.totalorder %s22, 2
      %p141 = por %p139, %p140
      %p143 = scmp.ne.s32.totalorder %s128, %s142
      %p144 = scmp.eq.s32.totalorder %s22, 0
      %p145 = por %p143, %p144
      %s146 = ssub.s32 %s24, %s31
      %s147 = ssub.s32 %s23, %s35
      %s148 = sor.u32 %s146, %s147
      %p149 = scmp.eq.s32.totalorder %s148, 0
      %s151 = sadd.s32 %s150, 1
      %s152 = scalar_select %p149, %s150, %s151
      %p155 = pneg %p149
      %p156 = scmp.eq.s32.totalorder %s16, 2
      %p157 = por %p155, %p156
      %p158 = scmp.ne.s32.totalorder %s150, %s153
      %p159 = scmp.eq.s32.totalorder %s16, 0
      %p160 = por %p158, %p159
      %p161 = scmp.ne.s32.totalorder %s150, %s153
      %p162 = scmp.eq.s32.totalorder %s21, 2
      %p163 = por %p161, %p162
      %p164 = scmp.ne.s32.totalorder %s153, %s154
      %p165 = scmp.eq.s32.totalorder %s21, 0
      %p166 = por %p164, %p165
      %p167 = scmp.ne.s32.totalorder %s153, %s154
      %p168 = scmp.eq.s32.totalorder %s22, 2
      %p169 = por %p167, %p168
      %p171 = scmp.ne.s32.totalorder %s154, %s170
      %p172 = scmp.eq.s32.totalorder %s22, 0
      %p173 = por %p171, %p172
      %p174 = scmp.le.s32.totalorder 1, %s16
      %p175 = scmp.lt.s32.totalorder %s16, 4
      %p176 = pnand %p174, %p175
      %p177 = pneg %p176
      // Predicated region
      $region9: #{tpu_custom_call.1} parent=5 // pred_check
        _
      $region10: #{tpu_custom_call.1} parent=5 // pred_check_branch
        %179 = sbr.rel (%p176) target = $region12
      $region11: #{tpu_custom_call.1} parent=5 // pred_region
        %s180 = ssub.s32 %s16, 1
        // Predicated region
        $region13: #{tpu_custom_call.1} parent=11 // pred_check
          %p181 = pneg %p54
        $region14: #{tpu_custom_call.1} parent=11 // pred_check_branch
          %183 = sbr.rel (%p181) target = $region16
        $region15: #{tpu_custom_call.1} parent=11 // pred_region
          %s184 = smul.u32 2, %s25
          %s186 = ssub.s32 256, 256
          %187 = vsyncadd [#allocation4], %s186
          %s188 = smul.addr %s184, 128
          %s189 = scalar_lea.hbm %s0, %s188
          %s190 = sshll.u32 [#allocation3], 4
          %s191 = int_to_ptr.vmem [resolvable:$true] %s190
          %196 = dma.hbm_to_vmem [thread:$0]  %s189, 256, %s191, [#allocation4], 128, 128, 8
        $region16: #{tpu_custom_call.1} parent=11 // pred_fallthru
          _
        // Predicated region
        $region17: #{tpu_custom_call.1} parent=11 // pred_check
          %p197 = pneg %p75
        $region18: #{tpu_custom_call.1} parent=11 // pred_check_branch
          %199 = sbr.rel (%p197) target = $region20
        $region19: #{tpu_custom_call.1} parent=11 // pred_region
          %s201 = ssub.s32 1024, 1024
          %202 = vsyncadd [#allocation7], %s201
          %s203 = sshll.u32 [#allocation6], 4
          %s204 = int_to_ptr.vmem [resolvable:$true] %s203
          %209 = dma.hbm_to_vmem [thread:$0]  %s1, 1024, %s204, [#allocation7], 64, 64, 4
        $region20: #{tpu_custom_call.1} parent=11 // pred_fallthru
          _
        // Predicated region
        $region21: #{tpu_custom_call.1} parent=11 // pred_check
          %p210 = pneg %p96
        $region22: #{tpu_custom_call.1} parent=11 // pred_check_branch
          %212 = sbr.rel (%p210) target = $region24
        $region23: #{tpu_custom_call.1} parent=11 // pred_region
          _
        $region24: #{tpu_custom_call.1} parent=11 // pred_fallthru
          _
        // Predicated region
        $region25: #{tpu_custom_call.1} parent=11 // pred_check
          %p213 = pneg %p117
        $region26: #{tpu_custom_call.1} parent=11 // pred_check_branch
          %215 = sbr.rel (%p213) target = $region28
        $region27: #{tpu_custom_call.1} parent=11 // pred_region
          %s217 = ssub.s32 1024, 1024
          %218 = vsyncadd [#allocation7], %s217
          %s219 = sshll.u32 [#allocation8], 4
          %s220 = int_to_ptr.vmem [resolvable:$true] %s219
          %225 = dma.hbm_to_vmem [thread:$0]  %s3, 1024, %s220, [#allocation7], 64, 64, 4
        $region28: #{tpu_custom_call.1} parent=11 // pred_fallthru
          _
        // Predicated region
        $region29: #{tpu_custom_call.1} parent=11 // pred_check
          %p226 = pneg %p138
        $region30: #{tpu_custom_call.1} parent=11 // pred_check_branch
          %228 = sbr.rel (%p226) target = $region32
        $region31: #{tpu_custom_call.1} parent=11 // pred_region
          _
        $region32: #{tpu_custom_call.1} parent=11 // pred_fallthru
          _
      $region12: #{tpu_custom_call.1} parent=5 // pred_fallthru
        _
      %p229 = scmp.lt.s32.totalorder %s16, 3
      // Predicated region
      $region33: #{tpu_custom_call.1} parent=5 // pred_check
        %p230 = pneg %p229
      $region34: #{tpu_custom_call.1} parent=5 // pred_check_branch
        %232 = sbr.rel (%p230) target = $region36
      $region35: #{tpu_custom_call.1} parent=5 // pred_region
        _
      $region36: #{tpu_custom_call.1} parent=5 // pred_fallthru
        _
      %p233 = scmp.le.s32.totalorder 1, %s16
      %p234 = scmp.lt.s32.totalorder %s16, 4
      %p235 = pnand %p233, %p234
      %p236 = pneg %p235
      // Predicated region
      $region37: #{tpu_custom_call.1} parent=5 // pred_check
        _
      $region38: #{tpu_custom_call.1} parent=5 // pred_check_branch
        %238 = sbr.rel (%p235) target = $region40
      $region39: #{tpu_custom_call.1} parent=5 // pred_region
        %s239 = ssub.s32 %s16, 1
        // Predicated region
        $region41: #{tpu_custom_call.1} parent=39 // pred_check
          %p240 = pneg %p54
        $region42: #{tpu_custom_call.1} parent=39 // pred_check_branch
          %242 = sbr.rel (%p240) target = $region44
        $region43: #{tpu_custom_call.1} parent=39 // pred_region
          %243 = dma.done [#allocation4], 256
        $region44: #{tpu_custom_call.1} parent=39 // pred_fallthru
          _
        // Predicated region
        $region45: #{tpu_custom_call.1} parent=39 // pred_check
          %p244 = pneg %p75
        $region46: #{tpu_custom_call.1} parent=39 // pred_check_branch
          %246 = sbr.rel (%p244) target = $region48
        $region47: #{tpu_custom_call.1} parent=39 // pred_region
          %247 = dma.done [#allocation7], 1024
        $region48: #{tpu_custom_call.1} parent=39 // pred_fallthru
          _
        // Predicated region
        $region49: #{tpu_custom_call.1} parent=39 // pred_check
          %p248 = pneg %p117
        $region50: #{tpu_custom_call.1} parent=39 // pred_check_branch
          %250 = sbr.rel (%p248) target = $region52
        $region51: #{tpu_custom_call.1} parent=39 // pred_region
          %251 = dma.done [#allocation7], 1024
        $region52: #{tpu_custom_call.1} parent=39 // pred_fallthru
          _
        %p252 = pneg %p54
        %p253 = pneg %p51
        %p254 = pneg %p75
        %p255 = pneg %p72
        %p256 = pneg %p96
        %p257 = pneg %p93
        %p258 = pneg %p117
        %p259 = pneg %p114
        %p260 = pneg %p138
        %p261 = pneg %p135
        %p262 = pneg %p166
        %p263 = pneg %p163
        %s264 = sand.u32 %s153, 1
        %s265 = scalar_lea.sflag [#allocation5], %s264
        %s266 = sand.u32 %s153, 1
        %s267 = smul.addr %s266, 16
        %s268 = scalar_lea.vmem [#allocation9], %s267
        %s269 = smul.u32 2, %s25
        %s270 = smul.u32 2, %s25
        %p272 = scmp.eq.s32.totalorder %s26, 0
        // Predicated region
        $region53: #{tpu_custom_call.1} parent=39 // pred_check
          %p273 = pneg %p272
        $region54: #{tpu_custom_call.1} parent=39 // pred_check_branch
          %275 = sbr.rel (%p273) target = $region56
        $region55: #{tpu_custom_call.1} parent=39 // pred_region
          %v276 = vld [vmem:[#allocation3] sm:$0xff]
          %v277 = vld [vmem:[#allocation3 + $0x8] sm:$0xff]
          %278 = vst [vmem:[#allocation2] sm:$0xff] %v276
          %279 = vst [vmem:[#allocation2 + $0x8] sm:$0xff] %v277
        $region56: #{tpu_custom_call.1} parent=39 // pred_fallthru
          _
        %v280 = vld [vmem:[#allocation2] sm:$0xff]
        %v281 = vld [vmem:[#allocation2 + $0x8] sm:$0xff]
        %v282 = vpack.c.bf16 %v281, %v280
        %v283 = vld [vmem:[#allocation6] sm:$0xf]
        %v284 = vld [vmem:[#allocation6 + $0x4] sm:$0xf]
        %v285 = vld [vmem:[#allocation6 + $0x8] sm:$0xf]
        %v286 = vld [vmem:[#allocation6 + $0xc] sm:$0xf]
        %v287 = vld [vmem:[#allocation6 + $0x10] sm:$0xf]
        %v288 = vld [vmem:[#allocation6 + $0x14] sm:$0xf]
        %v289 = vld [vmem:[#allocation6 + $0x18] sm:$0xf]
        %v290 = vld [vmem:[#allocation6 + $0x1c] sm:$0xf]
        %v291 = vld [vmem:[#allocation6 + $0x20] sm:$0xf]
        %v292 = vld [vmem:[#allocation6 + $0x24] sm:$0xf]
        %v293 = vld [vmem:[#allocation6 + $0x28] sm:$0xf]
        %v294 = vld [vmem:[#allocation6 + $0x2c] sm:$0xf]
        %v295 = vld [vmem:[#allocation6 + $0x30] sm:$0xf]
        %v296 = vld [vmem:[#allocation6 + $0x34] sm:$0xf]
        %v297 = vld [vmem:[#allocation6 + $0x38] sm:$0xf]
        %v298 = vld [vmem:[#allocation6 + $0x3c] sm:$0xf]
        %v299 = vld [vmem:[%s2] sm:$0x1]
        %v301 = vlaneseq
        %v302 = vshrl.u32 %v301, 7
        %v303 = vsub.s32 0, %v302
        %v304 = vrot.slane %v299, %v303
        %v322 = vunpack.c.l.b16 %v283
        %v323 = vunpack.c.l.b16 %v284
        %v324 = vunpack.c.l.b16 %v285
        %v325 = vunpack.c.l.b16 %v286
        %v326 = vunpack.c.l.b16 %v287
        %v327 = vunpack.c.l.b16 %v288
        %v328 = vunpack.c.l.b16 %v289
        %v329 = vunpack.c.l.b16 %v290
        %v330 = vunpack.c.l.b16 %v291
        %v331 = vunpack.c.l.b16 %v292
        %v332 = vunpack.c.l.b16 %v293
        %v333 = vunpack.c.l.b16 %v294
        %v334 = vunpack.c.l.b16 %v295
        %v335 = vunpack.c.l.b16 %v296
        %v336 = vunpack.c.l.b16 %v297
        %v337 = vunpack.c.l.b16 %v298
        %v338 = vpack.c.b16 %v323, %v322
        %v339 = vpack.c.b16 %v325, %v324
        %v340 = vpack.c.b16 %v327, %v326
        %v341 = vpack.c.b16 %v329, %v328
        %v342 = vpack.c.b16 %v331, %v330
        %v343 = vpack.c.b16 %v333, %v332
        %v344 = vpack.c.b16 %v335, %v334
        %v345 = vpack.c.b16 %v337, %v336
        %354 = vmatprep.subr.bf16.mxu0 0
        %355 = vmatpush1.bf16.msra.mxu0 %v338
        %356 = vmatprep.subr.bf16.mxu0 0
        %357 = vmatpush1.bf16.msra.mxu0 %v339
        %358 = vmatprep.subr.bf16.mxu0 0
        %359 = vmatpush1.bf16.msra.mxu0 %v340
        %360 = vmatprep.subr.bf16.mxu0 0
        %361 = vmatpush1.bf16.msra.mxu0 %v341
        %362 = vmatprep.subr.bf16.mxu0 0
        %363 = vmatpush1.bf16.msra.mxu0 %v342
        %364 = vmatprep.subr.bf16.mxu0 0
        %365 = vmatpush1.bf16.msra.mxu0 %v343
        %366 = vmatprep.subr.bf16.mxu0 0
        %367 = vmatpush1.bf16.msra.mxu0 %v344
        %368 = vmatprep.subr.bf16.mxu0 0
        %369 = vmatpush1.bf16.msra.mxu0 %v345
        %370 = vmatprep.subr.bf16.mxu0 0
        %371 = vmatpush1.bf16.msra.mxu0 0
        %372 = vmatprep.subr.bf16.mxu0 0
        %373 = vmatpush1.bf16.msra.mxu0 0
        %374 = vmatprep.subr.bf16.mxu0 0
        %375 = vmatpush1.bf16.msra.mxu0 0
        %376 = vmatprep.subr.bf16.mxu0 0
        %377 = vmatpush1.bf16.msra.mxu0 0
        %378 = vmatprep.subr.bf16.mxu0 0
        %379 = vmatpush1.bf16.msra.mxu0 0
        %380 = vmatprep.subr.bf16.mxu0 0
        %381 = vmatpush1.bf16.msra.mxu0 0
        %382 = vmatprep.subr.bf16.mxu0 0
        %383 = vmatpush1.bf16.msra.mxu0 0
        %384 = vmatprep.subr.bf16.mxu0 0
        %385 = vmatpush1.bf16.msra.mxu0 0
        %386 = vmatprep.mubr.bf16.mxu0 0
        %387 = vmatmul.mubr.bf16.gmra.mrb[0].mxu0 %v282
        %v388 = vpop.f32.mrb[0].mxu0
        %v389 = vadd.f32 %v304, %v388
        %v390 = vpop.f32.mrb[0].mxu0
        %v391 = vpop.f32.mrb[0].mxu0
        %v392 = vadd.f32 %v304, %v391
        %v393 = vpop.f32.mrb[0].mxu0
        %394 = vdwg.mxu0
        %v395 = vmul.f32 %v389, 0.5
        %v396 = vmul.f32 %v392, 0.5
        %v397 = vmul.f32 %v389, 0.044715
        %v398 = vmul.f32 %v392, 0.044715
        %v399 = vmul.f32 %v397, %v389
        %v400 = vmul.f32 %v398, %v392
        %v401 = vmul.f32 %v399, %v389
        %v402 = vmul.f32 %v400, %v392
        %v403 = vadd.f32 %v389, %v401
        %v404 = vadd.f32 %v392, %v402
        %v405 = vmul.f32 %v403, 0.7978846
        %v406 = vmul.f32 %v404, 0.7978846
        %v407 = vtanh.pop %v405
        %v408 = vtanh.pop %v406
        %v409 = vadd.f32 %v407, 1.0
        %v410 = vadd.f32 %v408, 1.0
        %v411 = vmul.f32 %v395, %v409
        %v412 = vmul.f32 %v396, %v410
        %v413 = vpack.c.bf16 %v412, %v411
        %v414 = vld [vmem:[#allocation8] sm:$0xf]
        %v415 = vld [vmem:[#allocation8 + $0x4] sm:$0xf]
        %v416 = vld [vmem:[#allocation8 + $0x8] sm:$0xf]
        %v417 = vld [vmem:[#allocation8 + $0xc] sm:$0xf]
        %v418 = vld [vmem:[#allocation8 + $0x10] sm:$0xf]
        %v419 = vld [vmem:[#allocation8 + $0x14] sm:$0xf]
        %v420 = vld [vmem:[#allocation8 + $0x18] sm:$0xf]
        %v421 = vld [vmem:[#allocation8 + $0x1c] sm:$0xf]
        %v422 = vld [vmem:[#allocation8 + $0x20] sm:$0xf]
        %v423 = vld [vmem:[#allocation8 + $0x24] sm:$0xf]
        %v424 = vld [vmem:[#allocation8 + $0x28] sm:$0xf]
        %v425 = vld [vmem:[#allocation8 + $0x2c] sm:$0xf]
        %v426 = vld [vmem:[#allocation8 + $0x30] sm:$0xf]
        %v427 = vld [vmem:[#allocation8 + $0x34] sm:$0xf]
        %v428 = vld [vmem:[#allocation8 + $0x38] sm:$0xf]
        %v429 = vld [vmem:[#allocation8 + $0x3c] sm:$0xf]
        %v430 = vld [vmem:[%s4] sm:$0x1]
        %v432 = vlaneseq
        %v433 = vshrl.u32 %v432, 7
        %v434 = vsub.s32 0, %v433
        %v435 = vrot.slane %v430, %v434
        %v453 = vunpack.c.l.b16 %v414
        %v454 = vunpack.c.l.b16 %v415
        %v455 = vunpack.c.l.b16 %v416
        %v456 = vunpack.c.l.b16 %v417
        %v457 = vunpack.c.l.b16 %v418
        %v458 = vunpack.c.l.b16 %v419
        %v459 = vunpack.c.l.b16 %v420
        %v460 = vunpack.c.l.b16 %v421
        %v461 = vunpack.c.l.b16 %v422
        %v462 = vunpack.c.l.b16 %v423
        %v463 = vunpack.c.l.b16 %v424
        %v464 = vunpack.c.l.b16 %v425
        %v465 = vunpack.c.l.b16 %v426
        %v466 = vunpack.c.l.b16 %v427
        %v467 = vunpack.c.l.b16 %v428
        %v468 = vunpack.c.l.b16 %v429
        %v469 = vpack.c.b16 %v454, %v453
        %v470 = vpack.c.b16 %v456, %v455
        %v471 = vpack.c.b16 %v458, %v457
        %v472 = vpack.c.b16 %v460, %v459
        %v473 = vpack.c.b16 %v462, %v461
        %v474 = vpack.c.b16 %v464, %v463
        %v475 = vpack.c.b16 %v466, %v465
        %v476 = vpack.c.b16 %v468, %v467
        %485 = vmatprep.subr.bf16.mxu0 0
        %486 = vmatpush1.bf16.msra.mxu0 %v469
        %487 = vmatprep.subr.bf16.mxu0 0
        %488 = vmatpush1.bf16.msra.mxu0 %v470
        %489 = vmatprep.subr.bf16.mxu0 0
        %490 = vmatpush1.bf16.msra.mxu0 %v471
        %491 = vmatprep.subr.bf16.mxu0 0
        %492 = vmatpush1.bf16.msra.mxu0 %v472
        %493 = vmatprep.subr.bf16.mxu0 0
        %494 = vmatpush1.bf16.msra.mxu0 %v473
        %495 = vmatprep.subr.bf16.mxu0 0
        %496 = vmatpush1.bf16.msra.mxu0 %v474
        %497 = vmatprep.subr.bf16.mxu0 0
        %498 = vmatpush1.bf16.msra.mxu0 %v475
        %499 = vmatprep.subr.bf16.mxu0 0
        %500 = vmatpush1.bf16.msra.mxu0 %v476
        %501 = vmatprep.subr.bf16.mxu0 0
        %502 = vmatpush1.bf16.msra.mxu0 0
        %503 = vmatprep.subr.bf16.mxu0 0
        %504 = vmatpush1.bf16.msra.mxu0 0
        %505 = vmatprep.subr.bf16.mxu0 0
        %506 = vmatpush1.bf16.msra.mxu0 0
        %507 = vmatprep.subr.bf16.mxu0 0
        %508 = vmatpush1.bf16.msra.mxu0 0
        %509 = vmatprep.subr.bf16.mxu0 0
        %510 = vmatpush1.bf16.msra.mxu0 0
        %511 = vmatprep.subr.bf16.mxu0 0
        %512 = vmatpush1.bf16.msra.mxu0 0
        %513 = vmatprep.subr.bf16.mxu0 0
        %514 = vmatpush1.bf16.msra.mxu0 0
        %515 = vmatprep.subr.bf16.mxu0 0
        %516 = vmatpush1.bf16.msra.mxu0 0
        %517 = vmatprep.mubr.bf16.mxu0 0
        %518 = vmatmul.mubr.bf16.gmra.mrb[0].mxu0 %v413
        %v519 = vpop.f32.mrb[0].mxu0
        %v520 = vadd.f32 %v435, %v519
        %v521 = vpop.f32.mrb[0].mxu0
        %v522 = vpop.f32.mrb[0].mxu0
        %v523 = vadd.f32 %v435, %v522
        %v524 = vpop.f32.mrb[0].mxu0
        %525 = vdwg.mxu0
        %v526 = vadd.f32 %v280, %v520
        %v527 = vadd.f32 %v281, %v523
        %528 = vst [vmem:[#allocation2] sm:$0xff] %v526
        %529 = vst [vmem:[#allocation2 + $0x8] sm:$0xff] %v527
        %530 = vst [vmem:[%s268] sm:$0xff] %v526
        %531 = vst [vmem:[%s268 + $0x8] sm:$0xff] %v527
        %s532 = sand.u32 %s153, 1
        %s533 = scalar_lea.sflag [#allocation5], %s532
        %s534 = sand.u32 %s153, 1
        %s535 = smul.addr %s534, 16
        %s536 = scalar_lea.vmem [#allocation9], %s535
        // Predicated region
        $region57: #{tpu_custom_call.1} parent=39 // pred_check
          %p537 = pneg %p163
        $region58: #{tpu_custom_call.1} parent=39 // pred_check_branch
          %539 = sbr.rel (%p537) target = $region60
        $region59: #{tpu_custom_call.1} parent=39 // pred_region
          %s540 = smul.u32 2, %s25
          %s542 = ssub.s32 256, 256
          %543 = vsyncadd %s533, %s542
          %s544 = smul.addr %s26, 2
          %s545 = sadd.s32 %s540, %s544
          %s546 = smul.addr %s545, 128
          %s547 = scalar_lea.hbm %s5, %s546
          %s548 = sshll.u32 %s536, 4
          %s549 = int_to_ptr.vmem [resolvable:$true] %s548
          %554 = dma.vmem_to_hbm [thread:$0]  %s549, 256, %s547, %s533, 128, 128, 8
        $region60: #{tpu_custom_call.1} parent=39 // pred_fallthru
          _
      $region40: #{tpu_custom_call.1} parent=5 // pred_fallthru
        _
      %p555 = scmp.le.s32.totalorder 2, %s16
      // Predicated region
      $region61: #{tpu_custom_call.1} parent=5 // pred_check
        %p556 = pneg %p555
      $region62: #{tpu_custom_call.1} parent=5 // pred_check_branch
        %558 = sbr.rel (%p556) target = $region64
      $region63: #{tpu_custom_call.1} parent=5 // pred_region
        %s559 = ssub.s32 %s16, 2
        // Predicated region
        $region65: #{tpu_custom_call.1} parent=63 // pred_check
          %p560 = pneg %p169
        $region66: #{tpu_custom_call.1} parent=63 // pred_check_branch
          %562 = sbr.rel (%p560) target = $region68
        $region67: #{tpu_custom_call.1} parent=63 // pred_region
          %s563 = sand.u32 %s154, 1
          %s564 = scalar_lea.sflag [#allocation5], %s563
          %s565 = sand.u32 %s154, 1
          %s566 = smul.addr %s565, 16
          %s567 = scalar_lea.vmem [#allocation9], %s566
          %568 = dma.done %s564, 256
        $region68: #{tpu_custom_call.1} parent=63 // pred_fallthru
          _
      $region64: #{tpu_custom_call.1} parent=5 // pred_fallthru
        _
    $region6: #{tpu_custom_call.1} parent=1 // loop_footer
      %s20 = sadd.s32 1, %s16
    $region7: #{tpu_custom_call.1} parent=1 // loop_footer_branch
      %15 = sbr.rel target = $region3
    $region8: #{tpu_custom_call.1} parent=1 // loop_exit
      _
    %569 = vsyncpa [#allocation4], 1
    %s570 = scalar_lea.sflag [#allocation4], 1
    %571 = vsyncpa %s570, 1
    %572 = vsyncpa [#allocation7], 1
    %573 = vsyncpa [#allocation5], 1
    %s574 = scalar_lea.sflag [#allocation5], 1
    %575 = vsyncpa %s574, 1

// kernel: tpu_custom_call.1
$region0: #{tpu_custom_call.1}
  #allocation0 [shape = 'u32[]', space=smem, size = 0x4, offset = 0x4, fixed_abs, tag = 'smem constant byte address 0x4 - core index']
  #allocation1 [shape = 'u32[144,128]{1,0:T(1,128)}', space=vmem, size = 0x12000, scoped, tag = 'internal scratch']
  #allocation2 [shape = 'f32[16,128]{1,0:T(8,128)}', space=vmem, size = 0x2000, scoped, tag = 'scratch operand']
  %s0 = inlined_call_operand.hbm [shape: f32[16,128], index: 0, kind: input, shape index: {}]
  %s1 = inlined_call_operand.hbm [shape: bf16[128,128], index: 1, kind: input, shape index: {}]
  %s2 = inlined_call_operand.vmem [shape: f32[1,128], index: 2, kind: input, shape index: {}]
  %s3 = inlined_call_operand.hbm [shape: bf16[128,128], index: 3, kind: input, shape index: {}]
  %s4 = inlined_call_operand.vmem [shape: f32[1,128], index: 4, kind: input, shape index: {}]
  %s5 = inlined_call_operand.hbm [shape: f32[3,16,128], index: 5, kind: output, shape index: {}]
  %s6 = sld [smem:[#allocation0]]
  $region69: #{tpu_custom_call.1} parent=0
    _
  %s8 = ssub.s32 1, %s6
  %s9 = scalar_select 0, %s8, %s6
  $region1: #{tpu_custom_call.1} parent=0
    #allocation3 [shape = 'u8[8192]{0}', space=vmem, size = 0x2000, scoped, tag = 'input window, operand 0, single buffered']
    #allocation4 [shape = 's32[2]{0}', space=sflag, size = 0x8, scoped, tag = 'scoped memory for tpu_custom_call.1']
    #allocation5 [shape = 's32[2]{0}', space=sflag, size = 0x8, scoped, tag = 'scoped memory for tpu_custom_call.1']
    #allocation6 [shape = 'u8[32768]{0}', space=vmem, size = 0x8000, scoped, tag = 'input window, operand 1, single buffered']
    #allocation7 [shape = 's32[1]{0}', space=sflag, size = 0x4, scoped, tag = 'scoped memory for tpu_custom_call.1']
    #allocation8 [shape = 'u8[32768]{0}', space=vmem, size = 0x8000, scoped, tag = 'input window, operand 3, single buffered']
    #allocation9 [shape = 'u8[16384]{0}', space=vmem, size = 0x4000, scoped, tag = 'output window, operand 0']
    %10 = vsyncpa [#allocation4], 0
    %11 = vsyncpa [#allocation7], 0
    %12 = vsyncpa [#allocation5], 0
    %s13 = scalar_lea.sflag [#allocation5], 1
    %14 = vsyncpa %s13, 0
    loop: start=0, step=1, limit=5
    $region2: #{tpu_custom_call.1} parent=1 // loop_pre_header
      _
    $region3: #{tpu_custom_call.1} parent=1 // loop_header
      %s16 = sphi 0, %s20
      %p17 = scmp.ge.s32.totalorder %s16, 5
      %s23 = sphi 0, %s35
      %s24 = sphi 0, %s31
      %s25 = sphi 0, %s23
      %s26 = sphi 0, %s24
      %s27 = sphi 0, %s25
      %s28 = sphi 0, %s26
      %s38 = sphi 0, %s40
      %s41 = sphi 0, %s38
      %s42 = sphi 0, %s41
      %s58 = sphi 0, %s42
      %s62 = sphi 0, %s62
      %s64 = sphi 0, %s62
      %s65 = sphi 0, %s64
      %s79 = sphi 0, %s65
      %s83 = sphi 0, %s83
      %s85 = sphi 0, %s83
      %s86 = sphi 0, %s85
      %s100 = sphi 0, %s86
      %s104 = sphi 0, %s104
      %s106 = sphi 0, %s104
      %s107 = sphi 0, %s106
      %s121 = sphi 0, %s107
      %s125 = sphi 0, %s125
      %s127 = sphi 0, %s125
      %s128 = sphi 0, %s127
      %s142 = sphi 0, %s128
      %s150 = sphi 0, %s152
      %s153 = sphi 0, %s150
      %s154 = sphi 0, %s153
      %s170 = sphi 0, %s154
    $region4: #{tpu_custom_call.1} parent=1 // loop_header_branch
      %19 = sbr.rel (%p17) target = $region8
    $region5: #{tpu_custom_call.1} parent=1 // loop_body
      %s21 = ssub.s32 %s16, 1
      %s22 = ssub.s32 %s16, 2
      %s29 = sadd.s32 1, %s24
      %p30 = scmp.ge.s32.totalorder %s29, 3
      %s31 = scalar_select %p30, 0, %s29
      %s32 = sadd.s32 1, %s23
      %s33 = scalar_select %p30, %s32, %s23
      %p34 = scmp.ge.s32.totalorder %s33, 1
      %s35 = scalar_select %p34, 0, %s33
      %s36 = ssub.s32 %s23, %s35
      %p37 = scmp.eq.s32.totalorder %s36, 0
      %s39 = sadd.s32 %s38, 1
      %s40 = scalar_select %p37, %s38, %s39
      %p43 = pneg %p37
      %p44 = scmp.eq.s32.totalorder %s16, 2
      %p45 = por %p43, %p44
      %p46 = scmp.ne.s32.totalorder %s38, %s41
      %p47 = scmp.eq.s32.totalorder %s16, 0
      %p48 = por %p46, %p47
      %p49 = scmp.ne.s32.totalorder %s38, %s41
      %p50 = scmp.eq.s32.totalorder %s21, 2
      %p51 = por %p49, %p50
      %p52 = scmp.ne.s32.totalorder %s41, %s42
      %p53 = scmp.eq.s32.totalorder %s21, 0
      %p54 = por %p52, %p53
      %p55 = scmp.ne.s32.totalorder %s41, %s42
      %p56 = scmp.eq.s32.totalorder %s22, 2
      %p57 = por %p55, %p56
      %p59 = scmp.ne.s32.totalorder %s42, %s58
      %p60 = scmp.eq.s32.totalorder %s22, 0
      %p61 = por %p59, %p60
      %s63 = sadd.s32 %s62, 1
      %p66 = scmp.eq.s32.totalorder %s16, 2
      %p67 = scmp.ne.s32.totalorder %s62, %s64
      %p68 = scmp.eq.s32.totalorder %s16, 0
      %p69 = por %p67, %p68
      %p70 = scmp.ne.s32.totalorder %s62, %s64
      %p71 = scmp.eq.s32.totalorder %s21, 2
      %p72 = por %p70, %p71
      %p73 = scmp.ne.s32.totalorder %s64, %s65
      %p74 = scmp.eq.s32.totalorder %s21, 0
      %p75 = por %p73, %p74
      %p76 = scmp.ne.s32.totalorder %s64, %s65
      %p77 = scmp.eq.s32.totalorder %s22, 2
      %p78 = por %p76, %p77
      %p80 = scmp.ne.s32.totalorder %s65, %s79
      %p81 = scmp.eq.s32.totalorder %s22, 0
      %p82 = por %p80, %p81
      %s84 = sadd.s32 %s83, 1
      %p87 = scmp.eq.s32.totalorder %s16, 2
      %p88 = scmp.ne.s32.totalorder %s83, %s85
      %p89 = scmp.eq.s32.totalorder %s16, 0
      %p90 = por %p88, %p89
      %p91 = scmp.ne.s32.totalorder %s83, %s85
      %p92 = scmp.eq.s32.totalorder %s21, 2
      %p93 = por %p91, %p92
      %p94 = scmp.ne.s32.totalorder %s85, %s86
      %p95 = scmp.eq.s32.totalorder %s21, 0
      %p96 = por %p94, %p95
      %p97 = scmp.ne.s32.totalorder %s85, %s86
      %p98 = scmp.eq.s32.totalorder %s22, 2
      %p99 = por %p97, %p98
      %p101 = scmp.ne.s32.totalorder %s86, %s100
      %p102 = scmp.eq.s32.totalorder %s22, 0
      %p103 = por %p101, %p102
      %s105 = sadd.s32 %s104, 1
      %p108 = scmp.eq.s32.totalorder %s16, 2
      %p109 = scmp.ne.s32.totalorder %s104, %s106
      %p110 = scmp.eq.s32.totalorder %s16, 0
      %p111 = por %p109, %p110
      %p112 = scmp.ne.s32.totalorder %s104, %s106
      %p113 = scmp.eq.s32.totalorder %s21, 2
      %p114 = por %p112, %p113
      %p115 = scmp.ne.s32.totalorder %s106, %s107
      %p116 = scmp.eq.s32.totalorder %s21, 0
      %p117 = por %p115, %p116
      %p118 = scmp.ne.s32.totalorder %s106, %s107
      %p119 = scmp.eq.s32.totalorder %s22, 2
      %p120 = por %p118, %p119
      %p122 = scmp.ne.s32.totalorder %s107, %s121
      %p123 = scmp.eq.s32.totalorder %s22, 0
      %p124 = por %p122, %p123
      %s126 = sadd.s32 %s125, 1
      %p129 = scmp.eq.s32.totalorder %s16, 2
      %p130 = scmp.ne.s32.totalorder %s125, %s127
      %p131 = scmp.eq.s32.totalorder %s16, 0
      %p132 = por %p130, %p131
      %p133 = scmp.ne.s32.totalorder %s125, %s127
      %p134 = scmp.eq.s32.totalorder %s21, 2
      %p135 = por %p133, %p134
      %p136 = scmp.ne.s32.totalorder %s127, %s128
      %p137 = scmp.eq.s32.totalorder %s21, 0
      %p138 = por %p136, %p137
      %p139 = scmp.ne.s32.totalorder %s127, %s128
      %p140 = scmp.eq.s32.totalorder %s22, 2
      %p141 = por %p139, %p140
      %p143 = scmp.ne.s32.totalorder %s128, %s142
      %p144 = scmp.eq.s32.totalorder %s22, 0
      %p145 = por %p143, %p144
      %s146 = ssub.s32 %s24, %s31
      %s147 = ssub.s32 %s23, %s35
      %s148 = sor.u32 %s146, %s147
      %p149 = scmp.eq.s32.totalorder %s148, 0
      %s151 = sadd.s32 %s150, 1
      %s152 = scalar_select %p149, %s150, %s151
      %p155 = pneg %p149
      %p156 = scmp.eq.s32.totalorder %s16, 2
      %p157 = por %p155, %p156
      %p158 = scmp.ne.s32.totalorder %s150, %s153
      %p159 = scmp.eq.s32.totalorder %s16, 0
      %p160 = por %p158, %p159
      %p161 = scmp.ne.s32.totalorder %s150, %s153
      %p162 = scmp.eq.s32.totalorder %s21, 2
      %p163 = por %p161, %p162
      %p164 = scmp.ne.s32.totalorder %s153, %s154
      %p165 = scmp.eq.s32.totalorder %s21, 0
      %p166 = por %p164, %p165
      %p167 = scmp.ne.s32.totalorder %s153, %s154
      %p168 = scmp.eq.s32.totalorder %s22, 2
      %p169 = por %p167, %p168
      %p171 = scmp.ne.s32.totalorder %s154, %s170
      %p172 = scmp.eq.s32.totalorder %s22, 0
      %p173 = por %p171, %p172
      %p174 = scmp.le.s32.totalorder 1, %s16
      %p175 = scmp.lt.s32.totalorder %s16, 4
      %p176 = pnand %p174, %p175
      %p177 = pneg %p176
      // Predicated region
      $region9: #{tpu_custom_call.1} parent=5 // pred_check
        _
      $region10: #{tpu_custom_call.1} parent=5 // pred_check_branch
        %179 = sbr.rel (%p176) target = $region12
      $region11: #{tpu_custom_call.1} parent=5 // pred_region
        %s180 = ssub.s32 %s16, 1
        // Predicated region
        $region13: #{tpu_custom_call.1} parent=11 // pred_check
          %p181 = pneg %p54
        $region14: #{tpu_custom_call.1} parent=11 // pred_check_branch
          %183 = sbr.rel (%p181) target = $region16
        $region15: #{tpu_custom_call.1} parent=11 // pred_region
          %s184 = smul.u32 2, %s25
          %s186 = ssub.s32 256, 256
          %187 = vsyncadd [#allocation4], %s186
          %s188 = smul.addr %s184, 128
          %s189 = scalar_lea.hbm %s0, %s188
          %s190 = sshll.u32 [#allocation3], 4
          %s191 = int_to_ptr.vmem [resolvable:$true] %s190
          %196 = dma.hbm_to_vmem [thread:$0]  %s189, 256, %s191, [#allocation4], 128, 128, 8
        $region16: #{tpu_custom_call.1} parent=11 // pred_fallthru
          _
        // Predicated region
        $region17: #{tpu_custom_call.1} parent=11 // pred_check
          %p197 = pneg %p75
        $region18: #{tpu_custom_call.1} parent=11 // pred_check_branch
          %199 = sbr.rel (%p197) target = $region20
        $region19: #{tpu_custom_call.1} parent=11 // pred_region
          %s201 = ssub.s32 1024, 1024
          %202 = vsyncadd [#allocation7], %s201
          %s203 = sshll.u32 [#allocation6], 4
          %s204 = int_to_ptr.vmem [resolvable:$true] %s203
          %209 = dma.hbm_to_vmem [thread:$0]  %s1, 1024, %s204, [#allocation7], 64, 64, 4
        $region20: #{tpu_custom_call.1} parent=11 // pred_fallthru
          _
        // Predicated region
        $region21: #{tpu_custom_call.1} parent=11 // pred_check
          %p210 = pneg %p96
        $region22: #{tpu_custom_call.1} parent=11 // pred_check_branch
          %212 = sbr.rel (%p210) target = $region24
        $region23: #{tpu_custom_call.1} parent=11 // pred_region
          _
        $region24: #{tpu_custom_call.1} parent=11 // pred_fallthru
          _
        // Predicated region
        $region25: #{tpu_custom_call.1} parent=11 // pred_check
          %p213 = pneg %p117
        $region26: #{tpu_custom_call.1} parent=11 // pred_check_branch
          %215 = sbr.rel (%p213) target = $region28
        $region27: #{tpu_custom_call.1} parent=11 // pred_region
          %s217 = ssub.s32 1024, 1024
          %218 = vsyncadd [#allocation7], %s217
          %s219 = sshll.u32 [#allocation8], 4
          %s220 = int_to_ptr.vmem [resolvable:$true] %s219
          %225 = dma.hbm_to_vmem [thread:$0]  %s3, 1024, %s220, [#allocation7], 64, 64, 4
        $region28: #{tpu_custom_call.1} parent=11 // pred_fallthru
          _
        // Predicated region
        $region29: #{tpu_custom_call.1} parent=11 // pred_check
          %p226 = pneg %p138
        $region30: #{tpu_custom_call.1} parent=11 // pred_check_branch
          %228 = sbr.rel (%p226) target = $region32
        $region31: #{tpu_custom_call.1} parent=11 // pred_region
          _
        $region32: #{tpu_custom_call.1} parent=11 // pred_fallthru
          _
      $region12: #{tpu_custom_call.1} parent=5 // pred_fallthru
        _
      %p229 = scmp.lt.s32.totalorder %s16, 3
      // Predicated region
      $region33: #{tpu_custom_call.1} parent=5 // pred_check
        %p230 = pneg %p229
      $region34: #{tpu_custom_call.1} parent=5 // pred_check_branch
        %232 = sbr.rel (%p230) target = $region36
      $region35: #{tpu_custom_call.1} parent=5 // pred_region
        _
      $region36: #{tpu_custom_call.1} parent=5 // pred_fallthru
        _
      %p233 = scmp.le.s32.totalorder 1, %s16
      %p234 = scmp.lt.s32.totalorder %s16, 4
      %p235 = pnand %p233, %p234
      %p236 = pneg %p235
      // Predicated region
      $region37: #{tpu_custom_call.1} parent=5 // pred_check
        _
      $region38: #{tpu_custom_call.1} parent=5 // pred_check_branch
        %238 = sbr.rel (%p235) target = $region40
      $region39: #{tpu_custom_call.1} parent=5 // pred_region
        %s239 = ssub.s32 %s16, 1
        // Predicated region
        $region41: #{tpu_custom_call.1} parent=39 // pred_check
          %p240 = pneg %p54
        $region42: #{tpu_custom_call.1} parent=39 // pred_check_branch
          %242 = sbr.rel (%p240) target = $region44
        $region43: #{tpu_custom_call.1} parent=39 // pred_region
          %243 = dma.done [#allocation4], 256
        $region44: #{tpu_custom_call.1} parent=39 // pred_fallthru
          _
        // Predicated region
        $region45: #{tpu_custom_call.1} parent=39 // pred_check
          %p244 = pneg %p75
        $region46: #{tpu_custom_call.1} parent=39 // pred_check_branch
          %246 = sbr.rel (%p244) target = $region48
        $region47: #{tpu_custom_call.1} parent=39 // pred_region
          %247 = dma.done [#allocation7], 1024
        $region48: #{tpu_custom_call.1} parent=39 // pred_fallthru
          _
        // Predicated region
        $region49: #{tpu_custom_call.1} parent=39 // pred_check
          %p248 = pneg %p117
        $region50: #{tpu_custom_call.1} parent=39 // pred_check_branch
          %250 = sbr.rel (%p248) target = $region52
        $region51: #{tpu_custom_call.1} parent=39 // pred_region
          %251 = dma.done [#allocation7], 1024
        $region52: #{tpu_custom_call.1} parent=39 // pred_fallthru
          _
        %p252 = pneg %p54
        %p253 = pneg %p51
        %p254 = pneg %p75
        %p255 = pneg %p72
        %p256 = pneg %p96
        %p257 = pneg %p93
        %p258 = pneg %p117
        %p259 = pneg %p114
        %p260 = pneg %p138
        %p261 = pneg %p135
        %p262 = pneg %p166
        %p263 = pneg %p163
        %s264 = sand.u32 %s153, 1
        %s265 = scalar_lea.sflag [#allocation5], %s264
        %s266 = sand.u32 %s153, 1
        %s267 = smul.addr %s266, 16
        %s268 = scalar_lea.vmem [#allocation9], %s267
        %s269 = smul.u32 2, %s25
        %s270 = smul.u32 2, %s25
        %p272 = scmp.eq.s32.totalorder %s26, 0
        // Predicated region
        $region53: #{tpu_custom_call.1} parent=39 // pred_check
          %p273 = pneg %p272
        $region54: #{tpu_custom_call.1} parent=39 // pred_check_branch
          %275 = sbr.rel (%p273) target = $region56
        $region55: #{tpu_custom_call.1} parent=39 // pred_region
          %v276 = vld [vmem:[#allocation3] sm:$0xff]
          %v277 = vld [vmem:[#allocation3 + $0x8] sm:$0xff]
          %278 = vst [vmem:[#allocation2] sm:$0xff] %v276
          %279 = vst [vmem:[#allocation2 + $0x8] sm:$0xff] %v277
        $region56: #{tpu_custom_call.1} parent=39 // pred_fallthru
          _
        %v280 = vld [vmem:[#allocation2] sm:$0xff]
        %v281 = vld [vmem:[#allocation2 + $0x8] sm:$0xff]
        %v282 = vpack.c.bf16 %v281, %v280
        %v283 = vld [vmem:[#allocation6] sm:$0xf]
        %v284 = vld [vmem:[#allocation6 + $0x4] sm:$0xf]
        %v285 = vld [vmem:[#allocation6 + $0x8] sm:$0xf]
        %v286 = vld [vmem:[#allocation6 + $0xc] sm:$0xf]
        %v287 = vld [vmem:[#allocation6 + $0x10] sm:$0xf]
        %v288 = vld [vmem:[#allocation6 + $0x14] sm:$0xf]
        %v289 = vld [vmem:[#allocation6 + $0x18] sm:$0xf]
        %v290 = vld [vmem:[#allocation6 + $0x1c] sm:$0xf]
        %v291 = vld [vmem:[#allocation6 + $0x20] sm:$0xf]
        %v292 = vld [vmem:[#allocation6 + $0x24] sm:$0xf]
        %v293 = vld [vmem:[#allocation6 + $0x28] sm:$0xf]
        %v294 = vld [vmem:[#allocation6 + $0x2c] sm:$0xf]
        %v295 = vld [vmem:[#allocation6 + $0x30] sm:$0xf]
        %v296 = vld [vmem:[#allocation6 + $0x34] sm:$0xf]
        %v297 = vld [vmem:[#allocation6 + $0x38] sm:$0xf]
        %v298 = vld [vmem:[#allocation6 + $0x3c] sm:$0xf]
        %v299 = vld [vmem:[%s2] sm:$0x1]
        %v301 = vlaneseq
        %v302 = vshrl.u32 %v301, 7
        %v303 = vsub.s32 0, %v302
        %v304 = vrot.slane %v299, %v303
        %v322 = vunpack.c.l.b16 %v283
        %v323 = vunpack.c.l.b16 %v284
        %v324 = vunpack.c.l.b16 %v285
        %v325 = vunpack.c.l.b16 %v286
        %v326 = vunpack.c.l.b16 %v287
        %v327 = vunpack.c.l.b16 %v288
        %v328 = vunpack.c.l.b16 %v289
        %v329 = vunpack.c.l.b16 %v290
        %v330 = vunpack.c.l.b16 %v291
        %v331 = vunpack.c.l.b16 %v292
        %v332 = vunpack.c.l.b16 %v293
        %v333 = vunpack.c.l.b16 %v294
        %v334 = vunpack.c.l.b16 %v295
        %v335 = vunpack.c.l.b16 %v296
        %v336 = vunpack.c.l.b16 %v297
        %v337 = vunpack.c.l.b16 %v298
        %v338 = vpack.c.b16 %v323, %v322
        %v339 = vpack.c.b16 %v325, %v324
        %v340 = vpack.c.b16 %v327, %v326
        %v341 = vpack.c.b16 %v329, %v328
        %v342 = vpack.c.b16 %v331, %v330
        %v343 = vpack.c.b16 %v333, %v332
        %v344 = vpack.c.b16 %v335, %v334
        %v345 = vpack.c.b16 %v337, %v336
        %354 = vmatprep.subr.bf16.mxu0 0
        %355 = vmatpush1.bf16.msra.mxu0 %v338
        %356 = vmatprep.subr.bf16.mxu0 0
        %357 = vmatpush1.bf16.msra.mxu0 %v339
        %358 = vmatprep.subr.bf16.mxu0 0
        %359 = vmatpush1.bf16.msra.mxu0 %v340
        %360 = vmatprep.subr.bf16.mxu0 0
        %361 = vmatpush1.bf16.msra.mxu0 %v341
        %362 = vmatprep.subr.bf16.mxu0 0
        %363 = vmatpush1.bf16.msra.mxu0 %v342
        %364 = vmatprep.subr.bf16.mxu0 0
        %365 = vmatpush1.bf16.msra.mxu0 %v343
        %366 = vmatprep.subr.bf16.mxu0 0
        %367 = vmatpush1.bf16.msra.mxu0 %v344
        %368 = vmatprep.subr.bf16.mxu0 0
        %369 = vmatpush1.bf16.msra.mxu0 %v345
        %370 = vmatprep.subr.bf16.mxu0 0
        %371 = vmatpush1.bf16.msra.mxu0 0
        %372 = vmatprep.subr.bf16.mxu0 0
        %373 = vmatpush1.bf16.msra.mxu0 0
        %374 = vmatprep.subr.bf16.mxu0 0
        %375 = vmatpush1.bf16.msra.mxu0 0
        %376 = vmatprep.subr.bf16.mxu0 0
        %377 = vmatpush1.bf16.msra.mxu0 0
        %378 = vmatprep.subr.bf16.mxu0 0
        %379 = vmatpush1.bf16.msra.mxu0 0
        %380 = vmatprep.subr.bf16.mxu0 0
        %381 = vmatpush1.bf16.msra.mxu0 0
        %382 = vmatprep.subr.bf16.mxu0 0
        %383 = vmatpush1.bf16.msra.mxu0 0
        %384 = vmatprep.subr.bf16.mxu0 0
        %385 = vmatpush1.bf16.msra.mxu0 0
        %386 = vmatprep.mubr.bf16.mxu0 0
        %387 = vmatmul.mubr.bf16.gmra.mrb[0].mxu0 %v282
        %v388 = vpop.f32.mrb[0].mxu0
        %v389 = vadd.f32 %v304, %v388
        %v390 = vpop.f32.mrb[0].mxu0
        %v391 = vpop.f32.mrb[0].mxu0
        %v392 = vadd.f32 %v304, %v391
        %v393 = vpop.f32.mrb[0].mxu0
        %394 = vdwg.mxu0
        %v395 = vmul.f32 %v389, 0.5
        %v396 = vmul.f32 %v392, 0.5
        %v397 = vmul.f32 %v389, 0.044715
        %v398 = vmul.f32 %v392, 0.044715
        %v399 = vmul.f32 %v397, %v389
        %v400 = vmul.f32 %v398, %v392
        %v401 = vmul.f32 %v399, %v389
        %v402 = vmul.f32 %v400, %v392
        %v403 = vadd.f32 %v389, %v401
        %v404 = vadd.f32 %v392, %v402
        %v405 = vmul.f32 %v403, 0.7978846
        %v406 = vmul.f32 %v404, 0.7978846
        %v407 = vtanh.pop %v405
        %v408 = vtanh.pop %v406
        %v409 = vadd.f32 %v407, 1.0
        %v410 = vadd.f32 %v408, 1.0
        %v411 = vmul.f32 %v395, %v409
        %v412 = vmul.f32 %v396, %v410
        %v413 = vpack.c.bf16 %v412, %v411
        %v414 = vld [vmem:[#allocation8] sm:$0xf]
        %v415 = vld [vmem:[#allocation8 + $0x4] sm:$0xf]
        %v416 = vld [vmem:[#allocation8 + $0x8] sm:$0xf]
        %v417 = vld [vmem:[#allocation8 + $0xc] sm:$0xf]
        %v418 = vld [vmem:[#allocation8 + $0x10] sm:$0xf]
        %v419 = vld [vmem:[#allocation8 + $0x14] sm:$0xf]
        %v420 = vld [vmem:[#allocation8 + $0x18] sm:$0xf]
        %v421 = vld [vmem:[#allocation8 + $0x1c] sm:$0xf]
        %v422 = vld [vmem:[#allocation8 + $0x20] sm:$0xf]
        %v423 = vld [vmem:[#allocation8 + $0x24] sm:$0xf]
        %v424 = vld [vmem:[#allocation8 + $0x28] sm:$0xf]
        %v425 = vld [vmem:[#allocation8 + $0x2c] sm:$0xf]
        %v426 = vld [vmem:[#allocation8 + $0x30] sm:$0xf]
        %v427 = vld [vmem:[#allocation8 + $0x34] sm:$0xf]
        %v428 = vld [vmem:[#allocation8 + $0x38] sm:$0xf]
        %v429 = vld [vmem:[#allocation8 + $0x3c] sm:$0xf]
        %v430 = vld [vmem:[%s4] sm:$0x1]
        %v432 = vlaneseq
        %v433 = vshrl.u32 %v432, 7
        %v434 = vsub.s32 0, %v433
        %v435 = vrot.slane %v430, %v434
        %v453 = vunpack.c.l.b16 %v414
        %v454 = vunpack.c.l.b16 %v415
        %v455 = vunpack.c.l.b16 %v416
        %v456 = vunpack.c.l.b16 %v417
        %v457 = vunpack.c.l.b16 %v418
        %v458 = vunpack.c.l.b16 %v419
        %v459 = vunpack.c.l.b16 %v420
        %v460 = vunpack.c.l.b16 %v421
        %v461 = vunpack.c.l.b16 %v422
        %v462 = vunpack.c.l.b16 %v423
        %v463 = vunpack.c.l.b16 %v424
        %v464 = vunpack.c.l.b16 %v425
        %v465 = vunpack.c.l.b16 %v426
        %v466 = vunpack.c.l.b16 %v427
        %v467 = vunpack.c.l.b16 %v428
        %v468 = vunpack.c.l.b16 %v429
        %v469 = vpack.c.b16 %v454, %v453
        %v470 = vpack.c.b16 %v456, %v455
        %v471 = vpack.c.b16 %v458, %v457
        %v472 = vpack.c.b16 %v460, %v459
        %v473 = vpack.c.b16 %v462, %v461
        %v474 = vpack.c.b16 %v464, %v463
        %v475 = vpack.c.b16 %v466, %v465
        %v476 = vpack.c.b16 %v468, %v467
        %485 = vmatprep.subr.bf16.mxu0 0
        %486 = vmatpush1.bf16.msra.mxu0 %v469
        %487 = vmatprep.subr.bf16.mxu0 0
        %488 = vmatpush1.bf16.msra.mxu0 %v470
        %489 = vmatprep.subr.bf16.mxu0 0
        %490 = vmatpush1.bf16.msra.mxu0 %v471
        %491 = vmatprep.subr.bf16.mxu0 0
        %492 = vmatpush1.bf16.msra.mxu0 %v472
        %493 = vmatprep.subr.bf16.mxu0 0
        %494 = vmatpush1.bf16.msra.mxu0 %v473
        %495 = vmatprep.subr.bf16.mxu0 0
        %496 = vmatpush1.bf16.msra.mxu0 %v474
        %497 = vmatprep.subr.bf16.mxu0 0
        %498 = vmatpush1.bf16.msra.mxu0 %v475
        %499 = vmatprep.subr.bf16.mxu0 0
        %500 = vmatpush1.bf16.msra.mxu0 %v476
        %501 = vmatprep.subr.bf16.mxu0 0
        %502 = vmatpush1.bf16.msra.mxu0 0
        %503 = vmatprep.subr.bf16.mxu0 0
        %504 = vmatpush1.bf16.msra.mxu0 0
        %505 = vmatprep.subr.bf16.mxu0 0
        %506 = vmatpush1.bf16.msra.mxu0 0
        %507 = vmatprep.subr.bf16.mxu0 0
        %508 = vmatpush1.bf16.msra.mxu0 0
        %509 = vmatprep.subr.bf16.mxu0 0
        %510 = vmatpush1.bf16.msra.mxu0 0
        %511 = vmatprep.subr.bf16.mxu0 0
        %512 = vmatpush1.bf16.msra.mxu0 0
        %513 = vmatprep.subr.bf16.mxu0 0
        %514 = vmatpush1.bf16.msra.mxu0 0
        %515 = vmatprep.subr.bf16.mxu0 0
        %516 = vmatpush1.bf16.msra.mxu0 0
        %517 = vmatprep.mubr.bf16.mxu0 0
        %518 = vmatmul.mubr.bf16.gmra.mrb[0].mxu0 %v413
        %v519 = vpop.f32.mrb[0].mxu0
        %v520 = vadd.f32 %v435, %v519
        %v521 = vpop.f32.mrb[0].mxu0
        %v522 = vpop.f32.mrb[0].mxu0
        %v523 = vadd.f32 %v435, %v522
        %v524 = vpop.f32.mrb[0].mxu0
        %525 = vdwg.mxu0
        %v526 = vadd.f32 %v280, %v520
        %v527 = vadd.f32 %v281, %v523
        %528 = vst [vmem:[#allocation2] sm:$0xff] %v526
        %529 = vst [vmem:[#allocation2 + $0x8] sm:$0xff] %v527
        %530 = vst [vmem:[%s268] sm:$0xff] %v526
        %531 = vst [vmem:[%s268 + $0x8] sm:$0xff] %v527
        %s532 = sand.u32 %s153, 1
        %s533 = scalar_lea.sflag [#allocation5], %s532
        %s534 = sand.u32 %s153, 1
        %s535 = smul.addr %s534, 16
        %s536 = scalar_lea.vmem [#allocation9], %s535
        // Predicated region
        $region57: #{tpu_custom_call.1} parent=39 // pred_check
          %p537 = pneg %p163
        $region58: #{tpu_custom_call.1} parent=39 // pred_check_branch
          %539 = sbr.rel (%p537) target = $region60
        $region59: #{tpu_custom_call.1} parent=39 // pred_region
          %s540 = smul.u32 2, %s25
          %s542 = ssub.s32 256, 256
          %543 = vsyncadd %s533, %s542
          %s544 = smul.addr %s26, 2
          %s545 = sadd.s32 %s540, %s544
          %s546 = smul.addr %s545, 128
          %s547 = scalar_lea.hbm %s5, %s546
          %s548 = sshll.u32 %s536, 4
          %s549 = int_to_ptr.vmem [resolvable:$true] %s548
          %554 = dma.vmem_to_hbm [thread:$0]  %s549, 256, %s547, %s533, 128, 128, 8
        $region60: #{tpu_custom_call.1} parent=39 // pred_fallthru
          _
      $region40: #{tpu_custom_call.1} parent=5 // pred_fallthru
        _
      %p555 = scmp.le.s32.totalorder 2, %s16
      // Predicated region
      $region61: #{tpu_custom_call.1} parent=5 // pred_check
        %p556 = pneg %p555
      $region62: #{tpu_custom_call.1} parent=5 // pred_check_branch
        %558 = sbr.rel (%p556) target = $region64
      $region63: #{tpu_custom_call.1} parent=5 // pred_region
        %s559 = ssub.s32 %s16, 2
        // Predicated region
        $region65: #{tpu_custom_call.1} parent=63 // pred_check
          %p560 = pneg %p169
        $region66: #{tpu_custom_call.1} parent=63 // pred_check_branch
          %562 = sbr.rel (%p560) target = $region68
        $region67: #{tpu_custom_call.1} parent=63 // pred_region
          %s563 = sand.u32 %s154, 1
          %s564 = scalar_lea.sflag [#allocation5], %s563
          %s565 = sand.u32 %s154, 1
          %s566 = smul.addr %s565, 16
          %s567 = scalar_lea.vmem [#allocation9], %s566
          %568 = dma.done %s564, 256
        $region68: #{tpu_custom_call.1} parent=63 // pred_fallthru
          _
      $region64: #{tpu_custom_call.1} parent=5 // pred_fallthru
        _
    $region6: #{tpu_custom_call.1} parent=1 // loop_footer
      %s20 = sadd.s32 1, %s16
    $region7: #{tpu_custom_call.1} parent=1 // loop_footer_branch
      %15 = sbr.rel target = $region3
    $region8: #{tpu_custom_call.1} parent=1 // loop_exit
      _
    %569 = vsyncpa [#allocation4], 1
    %s570 = scalar_lea.sflag [#allocation4], 1
    %571 = vsyncpa %s570, 1
    %572 = vsyncpa [#allocation7], 1
    %573 = vsyncpa [#allocation5], 1
    %s574 = scalar_lea.sflag [#allocation5], 1
    %575 = vsyncpa %s574, 1

</llo_original>
